<compile_context>
chip_gen: v5e
topology: v5e:2x2
jax: 0.10.0
libtpu: 0.0.40
codegen_flags: <defaults>
</compile_context>

<pallas_src>
import functools
import math

import jax
import jax.numpy as jnp
from jax.experimental import pallas as pl
from jax.experimental.pallas import tpu as pltpu

_EPS = 1e-6


def _rmsnorm_bias_kernel(x_ref, w_ref, b_ref, o_ref):
    """Plain path: one logical row per physical row (C is the full last dim)."""
    x = x_ref[...].astype(jnp.float32)                     # (tile_m, C)
    ms = jnp.mean(x * x, axis=-1, keepdims=True)           # (tile_m, 1)
    inv = jax.lax.rsqrt(ms + _EPS)
    w = w_ref[...].astype(jnp.float32)                     # (1, C)
    b = b_ref[...].astype(jnp.float32)
    o_ref[...] = (x * inv * w + b).astype(o_ref.dtype)


def _rmsnorm_bias_packed_kernel(x_ref, w_ref, b_ref, seg_ref, o_ref, *, inv_c):
    """Lane-packed path: `pack` consecutive logical rows sit side by side in one
    pack*C-wide (multiple-of-128-lane) physical row, so loads/stores are
    lane-dense.  The per-logical-row sum of squares + lane broadcast is a
    matmul against a block-diagonal ones matrix on the otherwise idle MXU.
    The x^2 operand is split into bf16 hi/lo parts (bf16x2) so the matmuls run
    at native bf16 MXU rate yet keep ~f32 accuracy (terms are non-negative and
    accumulation is f32, so relative error <= ~2^-18)."""
    x = x_ref[...].astype(jnp.float32)                     # (tile_m, W)
    ss = x * x
    ss_hi = ss.astype(jnp.bfloat16)
    ss_lo = (ss - ss_hi.astype(jnp.float32)).astype(jnp.bfloat16)
    seg = seg_ref[...]                                     # (W, W) bf16 block-diag ones
    sums = (jnp.dot(ss_hi, seg, preferred_element_type=jnp.float32)
            + jnp.dot(ss_lo, seg, preferred_element_type=jnp.float32))
    inv = jax.lax.rsqrt(sums * inv_c + _EPS)
    w = w_ref[...].astype(jnp.float32)                     # (1, W)  (weight tiled)
    b = b_ref[...].astype(jnp.float32)
    o_ref[...] = (x * inv * w + b).astype(o_ref.dtype)


def _sublane_multiple(dtype):
    return {4: 8, 2: 16, 1: 32}.get(jnp.dtype(dtype).itemsize, 8)


def _vmem_capacity_bytes():
    try:
        return int(pltpu.get_tpu_info().vmem_capacity_bytes)
    except Exception:
        return 64 * 1024 * 1024        # conservative fallback (v7x per-core VMEM)


def _round_up(x, m):
    return -(-x // m) * m


def _choose_tile_m(n_rows, row_width, dtype, f32_copies):
    """Largest row tile whose double-buffered in/out tiles plus in-kernel f32
    intermediates fit in ~half of this chip's VMEM (32 MiB v7x, 64 MiB
    v5e/v6e), rounded to the native sublane multiple.  Keep >= 2 grid steps
    when there is enough work so v7x's two TensorCores both get a block (one
    extra step is negligible, ~0.35 us, on single-core chips)."""
    sub = _sublane_multiple(dtype)
    itemsize = jnp.dtype(dtype).itemsize
    row_bytes = row_width * itemsize
    # 2 double-buffered input tiles + 2 double-buffered output tiles in the
    # input dtype, plus f32_copies full-tile f32 intermediates.
    per_row = 4 * row_bytes + f32_copies * row_width * 4
    budget = _vmem_capacity_bytes() // 2
    cap = max(sub, (budget // per_row) // sub * sub)
    if n_rows >= 2 * sub:
        cap = min(cap, _round_up(pl.cdiv(n_rows, 2), sub))   # >= 2 balanced steps
    tile = min(cap, _round_up(n_rows, sub))
    return int(max(sub, tile)), per_row


def withbias_layernorm(x, weight, bias):
    """x: (..., C); weight, bias: (C,).  Matches the PyTorch module:
    x * rsqrt(mean(x**2, -1, keepdim) + 1e-6) * weight + bias."""
    orig_shape = x.shape
    C = orig_shape[-1]
    assert weight.shape == (C,) and bias.shape == (C,)

    x2d = x.reshape(-1, C)
    M = x2d.shape[0]

    # Lane packing: whenever C is not a multiple of 128, pack the minimum
    # number of logical rows that makes the physical row width a multiple of
    # 128 (lane-dense loads/stores), bounded at 512 lanes.
    pack = 1
    if C % 128 != 0:
        p = 128 // math.gcd(C, 128)
        if p * C <= 512:
            pack = p

    itemsize = jnp.dtype(x.dtype).itemsize
    f32_copies = (2 if itemsize < 4 else 1) + (2 if pack > 1 else 0)

    if pack > 1:
        W = pack * C
        kernel = functools.partial(_rmsnorm_bias_packed_kernel, inv_c=1.0 / C)
        w_row = jnp.tile(weight, pack).reshape(1, W)
        b_row = jnp.tile(bias, pack).reshape(1, W)
        # Block-diagonal ones: seg[i, j] = 1 iff lanes i, j are in the same
        # logical row (segment of width C).  bf16 so the MXU runs native rate.
        lane_seg = jnp.arange(W, dtype=jnp.int32) // C
        seg = (lane_seg[:, None] == lane_seg[None, :]).astype(jnp.bfloat16)
        # The (M, C) -> (M // pack, W) reshape needs M % pack == 0; pad by at
        # most pack - 1 rows (rare).  The row grid itself stays ragged.
        pad_rows = (-M) % pack
        if pad_rows:
            x2d = jnp.pad(x2d, ((0, pad_rows), (0, 0)))
        n_rows = (M + pad_rows) // pack
        x_in = x2d.reshape(n_rows, W)
        extra_inputs = (seg,)
        extra_specs = [pl.BlockSpec((W, W), lambda i: (0, 0))]
        extra_vmem = 2 * W * W * 2          # seg double buffer (bf16)
    else:
        W = C
        kernel = _rmsnorm_bias_kernel
        w_row = weight.reshape(1, C)
        b_row = bias.reshape(1, C)
        pad_rows = 0
        n_rows = M
        x_in = x2d
        extra_inputs = ()
        extra_specs = []
        extra_vmem = 0

    tile_m, per_row = _choose_tile_m(n_rows, W, x.dtype, f32_copies)
    grid_m = pl.cdiv(n_rows, tile_m)        # ragged: last block may be partial

    capacity = _vmem_capacity_bytes()
    vmem_limit = int(min(capacity,
                         max(32 * 1024 * 1024,
                             int(per_row * tile_m * 1.3) + extra_vmem + (2 << 20))))

    out = pl.pallas_call(
        kernel,
        out_shape=jax.ShapeDtypeStruct((n_rows, W), x.dtype),
        grid_spec=pltpu.PrefetchScalarGridSpec(
            num_scalar_prefetch=0,
            grid=(grid_m,),
            in_specs=[
                pl.BlockSpec((tile_m, W), lambda i: (i, 0)),
                pl.BlockSpec((1, W), lambda i: (0, 0)),
                pl.BlockSpec((1, W), lambda i: (0, 0)),
            ] + extra_specs,
            out_specs=pl.BlockSpec((tile_m, W), lambda i: (i, 0)),
        ),
        compiler_params=pltpu.CompilerParams(
            dimension_semantics=("parallel",),
            vmem_limit_bytes=vmem_limit,
        ),
    )(x_in, w_row, b_row, *extra_inputs)

    out = out.reshape(n_rows * pack, C)
    if pad_rows:
        out = out[:M]
    return out.reshape(orig_shape)


def _reference(x, weight, bias):
    xf = x.astype(jnp.float32)
    ms = jnp.mean(xf * xf, axis=-1, keepdims=True)
    return (xf * jax.lax.rsqrt(ms + _EPS) * weight + bias).astype(x.dtype)


if __name__ == "__main__":
    key = jax.random.PRNGKey(0)
    k1, k2, k3, k4, k5 = jax.random.split(key, 5)

    # Case 1: (B, N, C) with C = 64 -> lane-packed path (pack=2, W=128), MXU
    # block-diagonal segment sum.
    B, N, C = 2, 8, 64
    x = jax.random.normal(k1, (B, N, C), dtype=jnp.float32)
    weight = 1.0 + 0.1 * jax.random.normal(k2, (C,), dtype=jnp.float32)
    bias = 0.1 * jax.random.normal(k3, (C,), dtype=jnp.float32)
    y = jax.block_until_ready(withbias_layernorm(x, weight, bias))
    assert jnp.allclose(y, _reference(x, weight, bias), atol=1e-5, rtol=1e-5), \
        "packed-path (C=64) mismatch vs reference"

    # Case 2: C = 128, ragged row count -> plain path, no padding, partial block.
    B2, N2, C2 = 3, 5, 128
    x2 = jax.random.normal(k4, (B2, N2, C2), dtype=jnp.float32)
    w2 = 1.0 + 0.05 * jnp.arange(C2, dtype=jnp.float32) / C2
    b2 = 0.01 * jnp.arange(C2, dtype=jnp.float32)
    y2 = jax.block_until_ready(withbias_layernorm(x2, w2, b2))
    assert jnp.allclose(y2, _reference(x2, w2, b2), atol=1e-5, rtol=1e-5), \
        "plain-path (C=128) mismatch vs reference"

    # Case 3: C = 96 (neither divisor nor multiple of 128), odd row count ->
    # generalized packing (pack=4, W=384) + minimal pack-divisibility padding.
    B3, N3, C3 = 2, 7, 96
    x3 = jax.random.normal(k5, (B3, N3, C3), dtype=jnp.float32)
    w3 = jnp.full((C3,), 1.3, dtype=jnp.float32)
    b3 = jnp.full((C3,), -0.2, dtype=jnp.float32)
    y3 = jax.block_until_ready(withbias_layernorm(x3, w3, b3))
    assert jnp.allclose(y3, _reference(x3, w3, b3), atol=1e-5, rtol=1e-5), \
        "packed-path (C=96) mismatch vs reference"

    print("KERNEL_OK")
</pallas_src>

<mosaic_0001>
module attributes {stable_mosaic.version = 11 : i64} {
  func.func @_rmsnorm_bias_packed_kernel(%arg0: i32, %arg1: memref<8x128xf32, #tpu.memory_space<vmem>>, %arg2: memref<1x128xf32, #tpu.memory_space<vmem>>, %arg3: memref<1x128xf32, #tpu.memory_space<vmem>>, %arg4: memref<128x128xbf16, #tpu.memory_space<vmem>>, %arg5: memref<8x128xf32, #tpu.memory_space<vmem>>) attributes {dimension_semantics = [#tpu.dimension_semantics<parallel>], iteration_bounds = array<i64: 1>, scalar_prefetch = 0 : i64, scratch_operands = 0 : i64, tpu.core_type = #tpu.core_type<tc>, window_params = [{transform_indices = @transform_0, window_bounds = array<i64: 8, 128>}, {pipeline_mode = #tpu.pipeline_mode<synchronous>, transform_indices = @transform_1, window_bounds = array<i64: 1, 128>}, {pipeline_mode = #tpu.pipeline_mode<synchronous>, transform_indices = @transform_2, window_bounds = array<i64: 1, 128>}, {pipeline_mode = #tpu.pipeline_mode<synchronous>, transform_indices = @transform_3, window_bounds = array<i64: 128, 128>}, {transform_indices = @transform_4, window_bounds = array<i64: 8, 128>}]} {
    %c0 = arith.constant 0 : index
    %c0_0 = arith.constant 0 : index
    %0 = vector.load %arg1[%c0, %c0_0] : memref<8x128xf32, #tpu.memory_space<vmem>>, vector<8x128xf32>
    %1 = arith.mulf %0, %0 : vector<8x128xf32>
    %2 = arith.truncf %1 : vector<8x128xf32> to vector<8x128xbf16>
    %3 = arith.extf %2 : vector<8x128xbf16> to vector<8x128xf32>
    %4 = arith.subf %1, %3 : vector<8x128xf32>
    %5 = arith.truncf %4 : vector<8x128xf32> to vector<8x128xbf16>
    %c0_1 = arith.constant 0 : index
    %c0_2 = arith.constant 0 : index
    %6 = vector.load %arg4[%c0_1, %c0_2] : memref<128x128xbf16, #tpu.memory_space<vmem>>, vector<128x128xbf16>
    %cst = arith.constant dense<0.000000e+00> : vector<8x128xf32>
    %7 = tpu.matmul %2, %6, %cst {dimension_numbers = #tpu.dot_dimension_numbers<[1], [0], [0], [1], [0, 0, 1, 1], [], []>} : vector<8x128xbf16>, vector<128x128xbf16>, vector<8x128xf32> -> vector<8x128xf32>
    %cst_3 = arith.constant dense<0.000000e+00> : vector<8x128xf32>
    %8 = tpu.matmul %5, %6, %cst_3 {dimension_numbers = #tpu.dot_dimension_numbers<[1], [0], [0], [1], [0, 0, 1, 1], [], []>} : vector<8x128xbf16>, vector<128x128xbf16>, vector<8x128xf32> -> vector<8x128xf32>
    %9 = arith.addf %7, %8 : vector<8x128xf32>
    %cst_4 = arith.constant 1.562500e-02 : f32
    %10 = vector.broadcast %cst_4 : f32 to vector<8x128xf32>
    %11 = arith.mulf %9, %10 : vector<8x128xf32>
    %cst_5 = arith.constant 9.99999997E-7 : f32
    %12 = vector.broadcast %cst_5 : f32 to vector<8x128xf32>
    %13 = arith.addf %11, %12 : vector<8x128xf32>
    %14 = math.rsqrt %13 : vector<8x128xf32>
    %c0_6 = arith.constant 0 : index
    %c0_7 = arith.constant 0 : index
    %15 = vector.load %arg2[%c0_6, %c0_7] : memref<1x128xf32, #tpu.memory_space<vmem>>, vector<1x128xf32>
    %c0_8 = arith.constant 0 : index
    %c0_9 = arith.constant 0 : index
    %16 = vector.load %arg3[%c0_8, %c0_9] : memref<1x128xf32, #tpu.memory_space<vmem>>, vector<1x128xf32>
    %17 = arith.mulf %0, %14 : vector<8x128xf32>
    %18 = vector.broadcast %15 : vector<1x128xf32> to vector<8x128xf32>
    %19 = arith.mulf %17, %18 : vector<8x128xf32>
    %20 = vector.broadcast %16 : vector<1x128xf32> to vector<8x128xf32>
    %21 = arith.addf %19, %20 : vector<8x128xf32>
    %c0_10 = arith.constant 0 : index
    %c0_11 = arith.constant 0 : index
    %22 = vector.load %arg5[%c0_10, %c0_11] : memref<8x128xf32, #tpu.memory_space<vmem>>, vector<8x128xf32>
    tpu.vector_store %arg5[%c0_10, %c0_11], %21 {strides = array<i32>} : memref<8x128xf32, #tpu.memory_space<vmem>>, vector<8x128xf32>,
    return
  }
  func.func @transform_0(%arg0: i32) -> (i32, i32) {
    %c0_i32 = arith.constant 0 : i32
    %c0_i32_0 = arith.constant 0 : i32
    return %arg0, %c0_i32 : i32, i32
  }
  func.func @transform_1(%arg0: i32) -> (i32, i32) {
    %c0_i32 = arith.constant 0 : i32
    %c0_i32_0 = arith.constant 0 : i32
    %c0_i32_1 = arith.constant 0 : i32
    return %c0_i32, %c0_i32_0 : i32, i32
  }
  func.func @transform_2(%arg0: i32) -> (i32, i32) {
    %c0_i32 = arith.constant 0 : i32
    %c0_i32_0 = arith.constant 0 : i32
    %c0_i32_1 = arith.constant 0 : i32
    return %c0_i32, %c0_i32_0 : i32, i32
  }
  func.func @transform_3(%arg0: i32) -> (i32, i32) {
    %c0_i32 = arith.constant 0 : i32
    %c0_i32_0 = arith.constant 0 : i32
    %c0_i32_1 = arith.constant 0 : i32
    return %c0_i32, %c0_i32_0 : i32, i32
  }
  func.func @transform_4(%arg0: i32) -> (i32, i32) {
    %c0_i32 = arith.constant 0 : i32
    %c0_i32_0 = arith.constant 0 : i32
    return %arg0, %c0_i32 : i32, i32
  }
}

</mosaic_0001>

<llo_original>
// kernel: tpu_custom_call.1
$region0: #{tpu_custom_call.1}
  #allocation0 [shape = 'u32[]', space=smem, size = 0x4, offset = 0x4, fixed_abs, tag = 'smem constant byte address 0x4 - core index']
  #allocation1 [shape = 'u32[72,128]{1,0:T(1,128)}', space=vmem, size = 0x9000, scoped, tag = 'internal scratch']
  %s0 = inlined_call_operand.hbm [shape: f32[8,128], index: 0, kind: input, shape index: {}]
  %s1 = inlined_call_operand.hbm [shape: f32[1,128], index: 1, kind: input, shape index: {}]
  %s2 = inlined_call_operand.vmem [shape: f32[1,128], index: 2, kind: input, shape index: {}]
  %s3 = inlined_call_operand.hbm [shape: bf16[128,128], index: 3, kind: input, shape index: {}]
  %s4 = inlined_call_operand.hbm [shape: f32[8,128], index: 4, kind: output, shape index: {}]
  %s5 = sld [smem:[#allocation0]]
  $region38: #{tpu_custom_call.1} parent=0
    _
  %s7 = ssub.s32 1, %s5
  %s8 = scalar_select 0, %s7, %s5
  $region1: #{tpu_custom_call.1} parent=0
    #allocation2 [shape = 'u8[4096]{0}', space=vmem, size = 0x1000, scoped, tag = 'input window, operand 0, single buffered']
    #allocation3 [shape = 's32[1]{0}', space=sflag, size = 0x4, scoped, tag = 'scoped memory for tpu_custom_call.1']
    #allocation4 [shape = 's32[1]{0}', space=sflag, size = 0x4, scoped, tag = 'scoped memory for tpu_custom_call.1']
    #allocation5 [shape = 'u8[512]{0}', space=vmem, size = 0x400, scoped, tag = 'input window, operand 1, single buffered']
    #allocation6 [shape = 's32[1]{0}', space=sflag, size = 0x4, scoped, tag = 'scoped memory for tpu_custom_call.1']
    #allocation7 [shape = 'u8[32768]{0}', space=vmem, size = 0x8000, scoped, tag = 'input window, operand 3, single buffered']
    #allocation8 [shape = 'u8[4096]{0}', space=vmem, size = 0x1000, scoped, tag = 'output window, operand 0, single buffered']
    %9 = vsyncpa [#allocation3], 0
    %10 = vsyncpa [#allocation6], 0
    %11 = vsyncpa [#allocation4], 0
    // Predicated region
    $region2: #{tpu_custom_call.1} parent=1 // pred_check
      _
    $region3: #{tpu_custom_call.1} parent=1 // pred_check_branch
      %13 = sbr.rel (0) target = $region5
    $region4: #{tpu_custom_call.1} parent=1 // pred_region
      %15 = vsyncadd [#allocation3], 0
      %s17 = sshll.u32 %s0, 4
      %s18 = int_to_ptr.hbm [resolvable:$true] %s17
      %s19 = sshll.u32 [#allocation2], 4
      %s20 = int_to_ptr.vmem [resolvable:$true] %s19
      %22 = dma.hbm_to_vmem [thread:$0]  %s18, 128, %s20, [#allocation3]
    $region5: #{tpu_custom_call.1} parent=1 // pred_fallthru
      _
    // Predicated region
    $region6: #{tpu_custom_call.1} parent=1 // pred_check
      _
    $region7: #{tpu_custom_call.1} parent=1 // pred_check_branch
      %24 = sbr.rel (0) target = $region9
    $region8: #{tpu_custom_call.1} parent=1 // pred_region
      %26 = vsyncadd [#allocation6], 0
      %s28 = sshll.u32 %s1, 4
      %s29 = int_to_ptr.hbm [resolvable:$true] %s28
      %s30 = sshll.u32 [#allocation5], 4
      %s31 = int_to_ptr.vmem [resolvable:$true] %s30
      %33 = dma.hbm_to_vmem [thread:$0]  %s29, 16, %s31, [#allocation6]
    $region9: #{tpu_custom_call.1} parent=1 // pred_fallthru
      _
    // Predicated region
    $region10: #{tpu_custom_call.1} parent=1 // pred_check
      _
    $region11: #{tpu_custom_call.1} parent=1 // pred_check_branch
      %35 = sbr.rel (0) target = $region13
    $region12: #{tpu_custom_call.1} parent=1 // pred_region
      _
    $region13: #{tpu_custom_call.1} parent=1 // pred_fallthru
      _
    // Predicated region
    $region14: #{tpu_custom_call.1} parent=1 // pred_check
      _
    $region15: #{tpu_custom_call.1} parent=1 // pred_check_branch
      %37 = sbr.rel (0) target = $region17
    $region16: #{tpu_custom_call.1} parent=1 // pred_region
      %39 = vsyncadd [#allocation6], 0
      %s40 = sshll.u32 %s3, 4
      %s41 = int_to_ptr.hbm [resolvable:$true] %s40
      %s42 = sshll.u32 [#allocation7], 4
      %s43 = int_to_ptr.vmem [resolvable:$true] %s42
      %48 = dma.hbm_to_vmem [thread:$0]  %s41, 1024, %s43, [#allocation6], 64, 64, 4
    $region17: #{tpu_custom_call.1} parent=1 // pred_fallthru
      _
    // Predicated region
    $region18: #{tpu_custom_call.1} parent=1 // pred_check
      _
    $region19: #{tpu_custom_call.1} parent=1 // pred_check_branch
      %50 = sbr.rel (0) target = $region21
    $region20: #{tpu_custom_call.1} parent=1 // pred_region
      %52 = dma.done [#allocation3], 128
    $region21: #{tpu_custom_call.1} parent=1 // pred_fallthru
      _
    // Predicated region
    $region22: #{tpu_custom_call.1} parent=1 // pred_check
      _
    $region23: #{tpu_custom_call.1} parent=1 // pred_check_branch
      %54 = sbr.rel (0) target = $region25
    $region24: #{tpu_custom_call.1} parent=1 // pred_region
      %56 = dma.done [#allocation6], 16
    $region25: #{tpu_custom_call.1} parent=1 // pred_fallthru
      _
    // Predicated region
    $region26: #{tpu_custom_call.1} parent=1 // pred_check
      _
    $region27: #{tpu_custom_call.1} parent=1 // pred_check_branch
      %58 = sbr.rel (0) target = $region29
    $region28: #{tpu_custom_call.1} parent=1 // pred_region
      %60 = dma.done [#allocation6], 1024
    $region29: #{tpu_custom_call.1} parent=1 // pred_fallthru
      _
    %v61 = vld [vmem:[#allocation2] sm:$0xff]
    %v62 = vmul.f32 %v61, %v61
    %v63 = vpack.c.bf16 %v62, %v62
    %v64 = vunpack.c.l.bf16 %v63
    %v65 = vsub.f32 %v62, %v64
    %v66 = vpack.c.bf16 %v65, %v65
    %v67 = vld [vmem:[#allocation7] sm:$0xf]
    %v68 = vld [vmem:[#allocation7 + $0x4] sm:$0xf]
    %v69 = vld [vmem:[#allocation7 + $0x8] sm:$0xf]
    %v70 = vld [vmem:[#allocation7 + $0xc] sm:$0xf]
    %v71 = vld [vmem:[#allocation7 + $0x10] sm:$0xf]
    %v72 = vld [vmem:[#allocation7 + $0x14] sm:$0xf]
    %v73 = vld [vmem:[#allocation7 + $0x18] sm:$0xf]
    %v74 = vld [vmem:[#allocation7 + $0x1c] sm:$0xf]
    %v75 = vld [vmem:[#allocation7 + $0x20] sm:$0xf]
    %v76 = vld [vmem:[#allocation7 + $0x24] sm:$0xf]
    %v77 = vld [vmem:[#allocation7 + $0x28] sm:$0xf]
    %v78 = vld [vmem:[#allocation7 + $0x2c] sm:$0xf]
    %v79 = vld [vmem:[#allocation7 + $0x30] sm:$0xf]
    %v80 = vld [vmem:[#allocation7 + $0x34] sm:$0xf]
    %v81 = vld [vmem:[#allocation7 + $0x38] sm:$0xf]
    %v82 = vld [vmem:[#allocation7 + $0x3c] sm:$0xf]
    %v99 = vunpack.c.l.b16 %v67
    %v100 = vunpack.c.l.b16 %v68
    %v101 = vunpack.c.l.b16 %v69
    %v102 = vunpack.c.l.b16 %v70
    %v103 = vunpack.c.l.b16 %v71
    %v104 = vunpack.c.l.b16 %v72
    %v105 = vunpack.c.l.b16 %v73
    %v106 = vunpack.c.l.b16 %v74
    %v107 = vunpack.c.l.b16 %v75
    %v108 = vunpack.c.l.b16 %v76
    %v109 = vunpack.c.l.b16 %v77
    %v110 = vunpack.c.l.b16 %v78
    %v111 = vunpack.c.l.b16 %v79
    %v112 = vunpack.c.l.b16 %v80
    %v113 = vunpack.c.l.b16 %v81
    %v114 = vunpack.c.l.b16 %v82
    %v115 = vpack.c.b16 %v100, %v99
    %v116 = vpack.c.b16 %v102, %v101
    %v117 = vpack.c.b16 %v104, %v103
    %v118 = vpack.c.b16 %v106, %v105
    %v119 = vpack.c.b16 %v108, %v107
    %v120 = vpack.c.b16 %v110, %v109
    %v121 = vpack.c.b16 %v112, %v111
    %v122 = vpack.c.b16 %v114, %v113
    %131 = vmatpush.bf16.msra.mxu0 %v122
    %132 = vmatpush.bf16.msra.mxu0 %v121
    %133 = vmatpush.bf16.msra.mxu0 %v120
    %134 = vmatpush.bf16.msra.mxu0 %v119
    %135 = vmatpush.bf16.msra.mxu0 %v118
    %136 = vmatpush.bf16.msra.mxu0 %v117
    %137 = vmatpush.bf16.msra.mxu0 %v116
    %138 = vmatpush.bf16.msra.mxu0 %v115
    %139 = vmatmul.bf16.gmra.mxu0 %v66
    %v140 = vpop.f32.mrf.mxu0
    %v141 = vadd.f32 0.0, %v140
    %v142 = vpop.f32.mrf.mxu0
    %143 = vdwg.mxu0
    %144 = vmatpush.bf16.msra.mxu0 %v122
    %145 = vmatpush.bf16.msra.mxu0 %v121
    %146 = vmatpush.bf16.msra.mxu0 %v120
    %147 = vmatpush.bf16.msra.mxu0 %v119
    %148 = vmatpush.bf16.msra.mxu0 %v118
    %149 = vmatpush.bf16.msra.mxu0 %v117
    %150 = vmatpush.bf16.msra.mxu0 %v116
    %151 = vmatpush.bf16.msra.mxu0 %v115
    %152 = vmatmul.bf16.gmra.mxu0 %v63
    %v153 = vpop.f32.mrf.mxu0
    %v154 = vadd.f32 %v141, %v153
    %v155 = vpop.f32.mrf.mxu0
    %156 = vdwg.mxu0
    %v157 = vmul.f32 %v154, 0.015625
    %v158 = vadd.f32 %v157, 1e-06
    %v159 = vrsqrt.pop %v158
    %v160 = vmul.f32 %v159, %v158
    %v161 = vmul.f32 %v160, %v159
    %v162 = vmul.f32 0.5, %v161
    %v163 = vsub.f32 1.5, %v162
    %v164 = vmul.f32 %v159, %v163
    %vm165 = vweird.f32 %v158
    %vm166 = vweird.f32 %v159
    %vm167 = vmor %vm165, %vm166
    %v168 = vsel %vm167, %v159, %v164
    %v169 = vld [vmem:[#allocation5] sm:$0x1]
    %v170 = vld [vmem:[%s2] sm:$0x1]
    %v171 = vmul.f32 %v61, %v168
    %v173 = vperm.slane %v169, 0
    %v175 = vmul.f32 %v171, %v173
    %v177 = vperm.slane %v170, 0
    %v179 = vadd.f32 %v175, %v177
    %180 = vst [vmem:[#allocation8] sm:$0xff] %v179
    // Predicated region
    $region30: #{tpu_custom_call.1} parent=1 // pred_check
      _
    $region31: #{tpu_custom_call.1} parent=1 // pred_check_branch
      %182 = sbr.rel (0) target = $region33
    $region32: #{tpu_custom_call.1} parent=1 // pred_region
      %184 = vsyncadd [#allocation4], 0
      %s186 = sshll.u32 [#allocation8], 4
      %s187 = int_to_ptr.vmem [resolvable:$true] %s186
      %s188 = sshll.u32 %s4, 4
      %s189 = int_to_ptr.hbm [resolvable:$true] %s188
      %191 = dma.vmem_to_hbm [thread:$0]  %s187, 128, %s189, [#allocation4]
    $region33: #{tpu_custom_call.1} parent=1 // pred_fallthru
      _
    // Predicated region
    $region34: #{tpu_custom_call.1} parent=1 // pred_check
      _
    $region35: #{tpu_custom_call.1} parent=1 // pred_check_branch
      %193 = sbr.rel (0) target = $region37
    $region36: #{tpu_custom_call.1} parent=1 // pred_region
      %195 = dma.done [#allocation4], 128
    $region37: #{tpu_custom_call.1} parent=1 // pred_fallthru
      _
    %196 = vsyncpa [#allocation3], 1
    %197 = vsyncpa [#allocation6], 1
    %198 = vsyncpa [#allocation4], 1

</llo_original>
